<compile_context>
chip_gen: v5e
topology: v5e:2x2
jax: 0.10.0
libtpu: 0.0.40
codegen_flags: <defaults>
</compile_context>

<pallas_src>
import jax
import jax.numpy as jnp
from jax.experimental import pallas as pl
from jax.experimental.pallas import tpu as pltpu


def _round_up(x: int, m: int) -> int:
    return ((x + m - 1) // m) * m


def _vmem_budget_bytes() -> int:
    """Per-generation VMEM budget (~75% of physical per-core VMEM, capped)."""
    cap = None
    try:
        info = pltpu.get_tpu_info()
        cap = int(getattr(info, "vmem_capacity_bytes", 0))
    except Exception:
        cap = None
    if not cap or cap <= 0:
        cap = 64 * 1024 * 1024  # conservative: safe on v5e/v6e/v7x
    return max(32 * 1024 * 1024, min((cap * 3) // 4, 100 * 1024 * 1024))


_TM_CANDIDATES = (1024, 768, 512, 384, 256, 128, 64, 32, 16, 8)


def _choose_tm(M, tm_max, per_tile_cost, per_row_cost, tm_req=None):
    """Pick a row tile: minimize (n_tiles * per_tile_cost + M_pad * per_row_cost),
    prefer >= 2 row tiles (keeps both v7x TensorCores busy), then the largest tile."""
    M8 = _round_up(max(M, 1), 8)
    if tm_req is not None:
        tm_eff = max(8, _round_up(min(int(tm_req), M8), 8))
        return tm_eff, _round_up(M8, tm_eff)
    cands = [c for c in _TM_CANDIDATES if c <= max(int(tm_max), 8)] or [8]
    best = None
    for c in cands:
        m_pad = _round_up(M8, c)
        n_tiles = m_pad // c
        cost = n_tiles * per_tile_cost + m_pad * per_row_cost
        key = (0 if n_tiles >= 2 else 1, cost, -c)
        if best is None or key < best[0]:
            best = (key, c, m_pad)
    return best[1], best[2]


# ---------------------------------------------------------------------------
# Kernels
# ---------------------------------------------------------------------------

def _ffn_resident_kernel(x_ref, w1_ref, b1_ref, w2_ref, b2_ref, o_ref):
    # Weights have constant block indices -> DMA'd from HBM once, VMEM-resident
    # for the whole grid.  x is cast to the MXU compute dtype in-kernel (VPU work
    # hidden under the matmuls), so the wrapper never rewrites x in HBM.
    x = x_ref[...].astype(w1_ref.dtype)
    h = jnp.dot(x, w1_ref[...], preferred_element_type=jnp.float32)
    h = jnp.maximum(h + b1_ref[...], 0.0)
    # TODO(synk): dropout omitted (eval/inference mode => identity); training-mode
    # dropout would mask h here via pltpu.prng_seed / pltpu.prng_random_bits.
    y = jnp.dot(h.astype(w2_ref.dtype), w2_ref[...],
                preferred_element_type=jnp.float32)
    o_ref[...] = (y + b2_ref[...]).astype(o_ref.dtype)


def _ffn_streaming_kernel(x_ref, w1_ref, b1_ref, w2_ref, b2_ref, o_ref, acc_ref):
    k = pl.program_id(1)

    @pl.when(k == 0)
    def _():
        acc_ref[...] = jnp.zeros_like(acc_ref)

    x = x_ref[...].astype(w1_ref.dtype)
    h = jnp.dot(x, w1_ref[...], preferred_element_type=jnp.float32)
    h = jnp.maximum(h + b1_ref[...], 0.0)
    acc_ref[...] += jnp.dot(h.astype(w2_ref.dtype), w2_ref[...],
                            preferred_element_type=jnp.float32)

    @pl.when(k == pl.num_programs(1) - 1)
    def _():
        o_ref[...] = (acc_ref[...] + b2_ref[...]).astype(o_ref.dtype)


# ---------------------------------------------------------------------------
# Wrapper
# ---------------------------------------------------------------------------

def positionwise_ffn(x, w1, b1, w2, b2, *, tm=None, tff=None,
                     compute_dtype=jnp.bfloat16, force_streaming=False):
    """x: [..., input_dim]; w1: [input_dim, ff_dim]; w2: [ff_dim, input_dim]."""
    lead = x.shape[:-1]
    d_in = x.shape[-1]
    d_ff = w1.shape[1]
    M = 1
    for s in lead:
        M *= int(s)
    out_dtype = x.dtype

    xsz = jnp.dtype(x.dtype).itemsize
    osz = jnp.dtype(out_dtype).itemsize
    csz = jnp.dtype(compute_dtype).itemsize
    budget = _vmem_budget_bytes()

    # Weights in the MXU compute dtype (callers should ideally store them in bf16
    # already so this cast is a no-op rather than an extra per-call HBM pass).
    w1c = w1 if w1.dtype == compute_dtype else w1.astype(compute_dtype)
    w2c = w2 if w2.dtype == compute_dtype else w2.astype(compute_dtype)
    b1_2d = b1.reshape(1, d_ff).astype(jnp.float32)
    b2_2d = b2.reshape(1, d_in).astype(jnp.float32)

    x2d = x.reshape(M, d_in)
    flops = 4 * M * d_in * d_ff  # two matmuls, 2*M*d_in*d_ff each
    # cost-model per-row term: HBM bytes for x/out + compute-equivalent bytes for
    # padded-row waste (~4*d_in*d_ff flops/row at a ~500 flops/byte crossover).
    per_row_cost = d_in * (xsz + osz) + (4 * d_in * d_ff) // 500

    # ---- mode decision: weights VMEM-resident vs streamed --------------------
    resident_fixed = 2 * (2 * d_in * d_ff * csz) + 2 * (d_ff + d_in) * 4
    resident_per_row_vmem = 2 * d_in * xsz + 2 * d_in * osz + d_ff * 4 + d_in * 4
    min_rows = max(8, min(_round_up(M, 8), 256))
    use_resident = (not force_streaming and
                    resident_fixed + min_rows * resident_per_row_vmem <= budget)

    if use_resident:
        tm_max = max(8, (budget - resident_fixed) // resident_per_row_vmem)
        per_tile_cost = 512 * 1024  # grid-step overhead stand-in
        tm_eff, M_pad = _choose_tm(M, tm_max, per_tile_cost, per_row_cost, tm)
        if M_pad != M:
            x2d = jnp.pad(x2d, ((0, M_pad - M), (0, 0)))

        grid = (M_pad // tm_eff,)
        bytes_accessed = int(M_pad * d_in * (xsz + osz)
                             + 2 * d_in * d_ff * csz + (d_ff + d_in) * 4)

        out2d = pl.pallas_call(
            _ffn_resident_kernel,
            out_shape=jax.ShapeDtypeStruct((M_pad, d_in), out_dtype),
            grid_spec=pltpu.PrefetchScalarGridSpec(
                num_scalar_prefetch=0,
                grid=grid,
                in_specs=[
                    pl.BlockSpec((tm_eff, d_in), lambda i: (i, 0)),  # x row tile
                    pl.BlockSpec((d_in, d_ff), lambda i: (0, 0)),    # W1 (resident)
                    pl.BlockSpec((1, d_ff), lambda i: (0, 0)),       # b1 (resident)
                    pl.BlockSpec((d_ff, d_in), lambda i: (0, 0)),    # W2 (resident)
                    pl.BlockSpec((1, d_in), lambda i: (0, 0)),       # b2 (resident)
                ],
                out_specs=pl.BlockSpec((tm_eff, d_in), lambda i: (i, 0)),
            ),
            compiler_params=pltpu.CompilerParams(
                dimension_semantics=("parallel",),
                vmem_limit_bytes=int(budget)),
            cost_estimate=pl.CostEstimate(flops=flops, transcendentals=0,
                                          bytes_accessed=bytes_accessed),
        )(x2d, w1c, b1_2d, w2c, b2_2d)

    else:
        # ---- streaming mode: d_ff is the (last, "arbitrary") reduction axis ----
        if tff is None:
            tff_eff = 128
            for t in (2048, 1024, 512, 256, 128):
                if 2 * (2 * d_in * t * csz) <= int(budget * 0.4):
                    tff_eff = t
                    break
        else:
            tff_eff = max(128, (min(int(tff), _round_up(d_ff, 128)) // 128) * 128)
        if d_ff <= tff_eff:
            tff_eff = d_ff
            dff_pad = d_ff
        else:
            dff_pad = _round_up(d_ff, tff_eff)

        w_chunk_vmem = 2 * (2 * d_in * tff_eff * csz) + 2 * (tff_eff + d_in) * 4
        per_row_vmem = 2 * d_in * xsz + 2 * d_in * osz + d_in * 4 + tff_eff * 4
        tm_max = max(8, (budget - w_chunk_vmem) // per_row_vmem)
        per_tile_cost = 2 * d_in * dff_pad * csz + 512 * 1024  # weight re-stream / tile
        tm_eff, M_pad = _choose_tm(M, tm_max, per_tile_cost, per_row_cost, tm)

        if dff_pad != d_ff:
            # Zero padding is exact: relu(x@0 + 0) = 0 contributes nothing through W2.
            w1c = jnp.pad(w1c, ((0, 0), (0, dff_pad - d_ff)))
            b1_2d = jnp.pad(b1_2d, ((0, 0), (0, dff_pad - d_ff)))
            w2c = jnp.pad(w2c, ((0, dff_pad - d_ff), (0, 0)))
        if M_pad != M:
            x2d = jnp.pad(x2d, ((0, M_pad - M), (0, 0)))

        grid = (M_pad // tm_eff, dff_pad // tff_eff)
        n_row_tiles = grid[0]
        # Under these BlockSpecs the weights are re-read once per row tile.
        bytes_accessed = int(M_pad * d_in * (xsz + osz)
                             + n_row_tiles * (2 * d_in * dff_pad * csz
                                              + dff_pad * 4 + grid[1] * d_in * 4))

        out2d = pl.pallas_call(
            _ffn_streaming_kernel,
            out_shape=jax.ShapeDtypeStruct((M_pad, d_in), out_dtype),
            grid_spec=pltpu.PrefetchScalarGridSpec(
                num_scalar_prefetch=0,
                grid=grid,
                in_specs=[
                    pl.BlockSpec((tm_eff, d_in), lambda i, k: (i, 0)),   # x row tile
                    pl.BlockSpec((d_in, tff_eff), lambda i, k: (0, k)),  # W1 column chunk
                    pl.BlockSpec((1, tff_eff), lambda i, k: (0, k)),     # b1 chunk
                    pl.BlockSpec((tff_eff, d_in), lambda i, k: (k, 0)),  # W2 row chunk
                    pl.BlockSpec((1, d_in), lambda i, k: (0, 0)),        # b2
                ],
                out_specs=pl.BlockSpec((tm_eff, d_in), lambda i, k: (i, 0)),
                scratch_shapes=[pltpu.VMEM((tm_eff, d_in), jnp.float32)],
            ),
            compiler_params=pltpu.CompilerParams(
                dimension_semantics=("parallel", "arbitrary"),
                vmem_limit_bytes=int(budget)),
            cost_estimate=pl.CostEstimate(flops=flops, transcendentals=0,
                                          bytes_accessed=bytes_accessed),
        )(x2d, w1c, b1_2d, w2c, b2_2d)

    out2d = out2d if M_pad == M else out2d[:M]
    return out2d.reshape(*lead, d_in)


def init_params(key, input_dim, ff_dim, dtype=jnp.float32):
    """Deterministic init matching torch.nn.Linear's uniform(-1/sqrt(fan_in), 1/sqrt(fan_in))."""
    k1, k2, k3, k4 = jax.random.split(key, 4)
    bound1 = 1.0 / (input_dim ** 0.5)
    bound2 = 1.0 / (ff_dim ** 0.5)
    # Stored pre-transposed ([in, out]) so the kernel computes x @ W + b.
    w1 = jax.random.uniform(k1, (input_dim, ff_dim), dtype, -bound1, bound1)
    b1 = jax.random.uniform(k2, (ff_dim,), dtype, -bound1, bound1)
    w2 = jax.random.uniform(k3, (ff_dim, input_dim), dtype, -bound2, bound2)
    b2 = jax.random.uniform(k4, (input_dim,), dtype, -bound2, bound2)
    return w1, b1, w2, b2


if __name__ == "__main__":
    key = jax.random.PRNGKey(0)
    # Small but lane-dense shapes (feature dims are multiples of 128).
    batch, seq, input_dim, ff_dim = 2, 8, 128, 256

    kx, kp = jax.random.split(key)
    x = jax.random.normal(kx, (batch, seq, input_dim), jnp.float32)
    w1, b1, w2, b2 = init_params(kp, input_dim, ff_dim)

    # ---- references -------------------------------------------------------
    h_ref = jnp.maximum(x.reshape(-1, input_dim) @ w1 + b1, 0.0)
    ref_f32 = (h_ref @ w2 + b2).reshape(batch, seq, input_dim)

    xb = x.reshape(-1, input_dim).astype(jnp.bfloat16)
    hb = jnp.maximum(
        jnp.dot(xb, w1.astype(jnp.bfloat16), preferred_element_type=jnp.float32) + b1, 0.0)
    ref_bf16 = (jnp.dot(hb.astype(jnp.bfloat16), w2.astype(jnp.bfloat16),
                        preferred_element_type=jnp.float32) + b2
                ).astype(x.dtype).reshape(batch, seq, input_dim)

    # ---- resident-weights path, f32 compute -------------------------------
    out_f32 = jax.block_until_ready(
        positionwise_ffn(x, w1, b1, w2, b2, compute_dtype=jnp.float32))
    assert out_f32.shape == (batch, seq, input_dim)
    assert jnp.allclose(out_f32, ref_f32, atol=2e-3, rtol=2e-3), "resident f32 mismatch"

    # ---- resident-weights path, default bf16 compute -----------------------
    out_bf16 = jax.block_until_ready(positionwise_ffn(x, w1, b1, w2, b2))
    assert jnp.allclose(out_bf16, ref_bf16, atol=3e-2, rtol=3e-2), "resident bf16 mismatch"

    # ---- streaming path: exercise the d_ff reduction axis (2 chunks) and
    #      multiple row tiles ------------------------------------------------
    out_stream = jax.block_until_ready(
        positionwise_ffn(x, w1, b1, w2, b2, tm=8, tff=128, force_streaming=True))
    assert jnp.allclose(out_stream, ref_bf16, atol=3e-2, rtol=3e-2), "streaming mismatch"

    print("KERNEL_OK")
</pallas_src>

<mosaic_0001>
module attributes {stable_mosaic.version = 11 : i64} {
  func.func @_ffn_resident_kernel(%arg0: i32, %arg1: memref<8x128xf32, #tpu.memory_space<vmem>>, %arg2: memref<128x256xf32, #tpu.memory_space<vmem>>, %arg3: memref<1x256xf32, #tpu.memory_space<vmem>>, %arg4: memref<256x128xf32, #tpu.memory_space<vmem>>, %arg5: memref<1x128xf32, #tpu.memory_space<vmem>>, %arg6: memref<8x128xf32, #tpu.memory_space<vmem>>) attributes {dimension_semantics = [#tpu.dimension_semantics<parallel>], iteration_bounds = array<i64: 2>, scalar_prefetch = 0 : i64, scratch_operands = 0 : i64, tpu.core_type = #tpu.core_type<tc>, window_params = [{transform_indices = @transform_0, window_bounds = array<i64: 8, 128>}, {pipeline_mode = #tpu.pipeline_mode<synchronous>, transform_indices = @transform_1, window_bounds = array<i64: 128, 256>}, {pipeline_mode = #tpu.pipeline_mode<synchronous>, transform_indices = @transform_2, window_bounds = array<i64: 1, 256>}, {pipeline_mode = #tpu.pipeline_mode<synchronous>, transform_indices = @transform_3, window_bounds = array<i64: 256, 128>}, {pipeline_mode = #tpu.pipeline_mode<synchronous>, transform_indices = @transform_4, window_bounds = array<i64: 1, 128>}, {transform_indices = @transform_5, window_bounds = array<i64: 8, 128>}]} {
    %c0 = arith.constant 0 : index
    %c0_0 = arith.constant 0 : index
    %0 = vector.load %arg1[%c0, %c0_0] : memref<8x128xf32, #tpu.memory_space<vmem>>, vector<8x128xf32>
    %c0_1 = arith.constant 0 : index
    %c0_2 = arith.constant 0 : index
    %1 = vector.load %arg2[%c0_1, %c0_2] : memref<128x256xf32, #tpu.memory_space<vmem>>, vector<128x256xf32>
    %cst = arith.constant dense<0.000000e+00> : vector<8x256xf32>
    %2 = tpu.matmul %0, %1, %cst {dimension_numbers = #tpu.dot_dimension_numbers<[1], [0], [0], [1], [0, 0, 1, 1], [], []>} : vector<8x128xf32>, vector<128x256xf32>, vector<8x256xf32> -> vector<8x256xf32>
    %c0_3 = arith.constant 0 : index
    %c0_4 = arith.constant 0 : index
    %3 = vector.load %arg3[%c0_3, %c0_4] : memref<1x256xf32, #tpu.memory_space<vmem>>, vector<1x256xf32>
    %4 = vector.broadcast %3 : vector<1x256xf32> to vector<8x256xf32>
    %5 = arith.addf %2, %4 : vector<8x256xf32>
    %cst_5 = arith.constant 0.000000e+00 : f32
    %6 = vector.broadcast %cst_5 : f32 to vector<8x256xf32>
    %7 = arith.maximumf %5, %6 : vector<8x256xf32>
    %c0_6 = arith.constant 0 : index
    %c0_7 = arith.constant 0 : index
    %8 = vector.load %arg4[%c0_6, %c0_7] : memref<256x128xf32, #tpu.memory_space<vmem>>, vector<256x128xf32>
    %cst_8 = arith.constant dense<0.000000e+00> : vector<8x128xf32>
    %9 = tpu.matmul %7, %8, %cst_8 {dimension_numbers = #tpu.dot_dimension_numbers<[1], [0], [0], [1], [0, 0, 1, 1], [], []>} : vector<8x256xf32>, vector<256x128xf32>, vector<8x128xf32> -> vector<8x128xf32>
    %c0_9 = arith.constant 0 : index
    %c0_10 = arith.constant 0 : index
    %10 = vector.load %arg5[%c0_9, %c0_10] : memref<1x128xf32, #tpu.memory_space<vmem>>, vector<1x128xf32>
    %11 = vector.broadcast %10 : vector<1x128xf32> to vector<8x128xf32>
    %12 = arith.addf %9, %11 : vector<8x128xf32>
    %c0_11 = arith.constant 0 : index
    %c0_12 = arith.constant 0 : index
    %13 = vector.load %arg6[%c0_11, %c0_12] : memref<8x128xf32, #tpu.memory_space<vmem>>, vector<8x128xf32>
    tpu.vector_store %arg6[%c0_11, %c0_12], %12 {strides = array<i32>} : memref<8x128xf32, #tpu.memory_space<vmem>>, vector<8x128xf32>,
    return
  }
  func.func @transform_0(%arg0: i32) -> (i32, i32) {
    %c0_i32 = arith.constant 0 : i32
    %c0_i32_0 = arith.constant 0 : i32
    return %arg0, %c0_i32 : i32, i32
  }
  func.func @transform_1(%arg0: i32) -> (i32, i32) {
    %c0_i32 = arith.constant 0 : i32
    %c0_i32_0 = arith.constant 0 : i32
    %c0_i32_1 = arith.constant 0 : i32
    return %c0_i32, %c0_i32_0 : i32, i32
  }
  func.func @transform_2(%arg0: i32) -> (i32, i32) {
    %c0_i32 = arith.constant 0 : i32
    %c0_i32_0 = arith.constant 0 : i32
    %c0_i32_1 = arith.constant 0 : i32
    return %c0_i32, %c0_i32_0 : i32, i32
  }
  func.func @transform_3(%arg0: i32) -> (i32, i32) {
    %c0_i32 = arith.constant 0 : i32
    %c0_i32_0 = arith.constant 0 : i32
    %c0_i32_1 = arith.constant 0 : i32
    return %c0_i32, %c0_i32_0 : i32, i32
  }
  func.func @transform_4(%arg0: i32) -> (i32, i32) {
    %c0_i32 = arith.constant 0 : i32
    %c0_i32_0 = arith.constant 0 : i32
    %c0_i32_1 = arith.constant 0 : i32
    return %c0_i32, %c0_i32_0 : i32, i32
  }
  func.func @transform_5(%arg0: i32) -> (i32, i32) {
    %c0_i32 = arith.constant 0 : i32
    %c0_i32_0 = arith.constant 0 : i32
    return %arg0, %c0_i32 : i32, i32
  }
}

</mosaic_0001>

<llo_original>
// kernel: tpu_custom_call.1
$region0: #{tpu_custom_call.1}
  #allocation0 [shape = 'u32[]', space=smem, size = 0x4, offset = 0x4, fixed_abs, tag = 'smem constant byte address 0x4 - core index']
  #allocation1 [shape = 'u32[72,128]{1,0:T(1,128)}', space=vmem, size = 0x9000, scoped, tag = 'internal scratch']
  %s0 = inlined_call_operand.hbm [shape: f32[16,128], index: 0, kind: input, shape index: {}]
  %s1 = inlined_call_operand.hbm [shape: f32[128,256], index: 1, kind: input, shape index: {}]
  %s2 = inlined_call_operand.hbm [shape: f32[1,256], index: 2, kind: input, shape index: {}]
  %s3 = inlined_call_operand.hbm [shape: f32[256,128], index: 3, kind: input, shape index: {}]
  %s4 = inlined_call_operand.vmem [shape: f32[1,128], index: 4, kind: input, shape index: {}]
  %s5 = inlined_call_operand.hbm [shape: f32[16,128], index: 5, kind: output, shape index: {}]
  %s6 = sld [smem:[#allocation0]]
  $region69: #{tpu_custom_call.1} parent=0
    _
  %s8 = ssub.s32 1, %s6
  %s9 = scalar_select 0, %s8, %s6
  $region1: #{tpu_custom_call.1} parent=0
    #allocation2 [shape = 'u8[8192]{0}', space=vmem, size = 0x2000, scoped, tag = 'input window, operand 0']
    #allocation3 [shape = 's32[2]{0}', space=sflag, size = 0x8, scoped, tag = 'scoped memory for tpu_custom_call.1']
    #allocation4 [shape = 's32[2]{0}', space=sflag, size = 0x8, scoped, tag = 'scoped memory for tpu_custom_call.1']
    #allocation5 [shape = 'u8[131072]{0}', space=vmem, size = 0x20000, scoped, tag = 'input window, operand 1, single buffered']
    #allocation6 [shape = 's32[1]{0}', space=sflag, size = 0x4, scoped, tag = 'scoped memory for tpu_custom_call.1']
    #allocation7 [shape = 'u8[1024]{0}', space=vmem, size = 0x400, scoped, tag = 'input window, operand 2, single buffered']
    #allocation8 [shape = 'u8[131072]{0}', space=vmem, size = 0x20000, scoped, tag = 'input window, operand 3, single buffered']
    #allocation9 [shape = 's32[1]{0}', space=sflag, size = 0x4, scoped, tag = 'scoped memory for tpu_custom_call.1']
    #allocation10 [shape = 'u8[8192]{0}', space=vmem, size = 0x2000, scoped, tag = 'output window, operand 0']
    %10 = vsyncpa [#allocation3], 0
    %s11 = scalar_lea.sflag [#allocation3], 1
    %12 = vsyncpa %s11, 0
    %13 = vsyncpa [#allocation6], 0
    %14 = vsyncpa [#allocation9], 0
    %15 = vsyncpa [#allocation4], 0
    %s16 = scalar_lea.sflag [#allocation4], 1
    %17 = vsyncpa %s16, 0
    loop: start=0, step=1, limit=4
    $region2: #{tpu_custom_call.1} parent=1 // loop_pre_header
      _
    $region3: #{tpu_custom_call.1} parent=1 // loop_header
      %s19 = sphi 0, %s23
      %p20 = scmp.ge.s32.totalorder %s19, 4
      %s29 = sphi 0, %s31
      %s32 = sphi 0, %s29
      %s33 = sphi 0, %s32
      %s49 = sphi 0, %s33
      %s53 = sphi 0, %s53
      %s55 = sphi 0, %s53
      %s56 = sphi 0, %s55
      %s70 = sphi 0, %s56
      %s74 = sphi 0, %s74
      %s76 = sphi 0, %s74
      %s77 = sphi 0, %s76
      %s91 = sphi 0, %s77
      %s95 = sphi 0, %s95
      %s97 = sphi 0, %s95
      %s98 = sphi 0, %s97
      %s112 = sphi 0, %s98
      %s116 = sphi 0, %s116
      %s118 = sphi 0, %s116
      %s119 = sphi 0, %s118
      %s133 = sphi 0, %s119
      %s139 = sphi 0, %s141
      %s142 = sphi 0, %s139
      %s143 = sphi 0, %s142
      %s159 = sphi 0, %s143
    $region4: #{tpu_custom_call.1} parent=1 // loop_header_branch
      %22 = sbr.rel (%p20) target = $region8
    $region5: #{tpu_custom_call.1} parent=1 // loop_body
      %s24 = ssub.s32 %s19, 1
      %s25 = ssub.s32 %s19, 2
      %s26 = sadd.s32 %s19, 1
      %s27 = ssub.s32 %s19, %s26
      %p28 = scmp.eq.s32.totalorder %s27, 0
      %s30 = sadd.s32 %s29, 1
      %s31 = scalar_select %p28, %s29, %s30
      %p34 = pneg %p28
      %p35 = scmp.eq.s32.totalorder %s19, 1
      %p36 = por %p34, %p35
      %p37 = scmp.ne.s32.totalorder %s29, %s32
      %p38 = scmp.eq.s32.totalorder %s19, 0
      %p39 = por %p37, %p38
      %p40 = scmp.ne.s32.totalorder %s29, %s32
      %p41 = scmp.eq.s32.totalorder %s24, 1
      %p42 = por %p40, %p41
      %p43 = scmp.ne.s32.totalorder %s32, %s33
      %p44 = scmp.eq.s32.totalorder %s24, 0
      %p45 = por %p43, %p44
      %p46 = scmp.ne.s32.totalorder %s32, %s33
      %p47 = scmp.eq.s32.totalorder %s25, 1
      %p48 = por %p46, %p47
      %p50 = scmp.ne.s32.totalorder %s33, %s49
      %p51 = scmp.eq.s32.totalorder %s25, 0
      %p52 = por %p50, %p51
      %s54 = sadd.s32 %s53, 1
      %p57 = scmp.eq.s32.totalorder %s19, 1
      %p58 = scmp.ne.s32.totalorder %s53, %s55
      %p59 = scmp.eq.s32.totalorder %s19, 0
      %p60 = por %p58, %p59
      %p61 = scmp.ne.s32.totalorder %s53, %s55
      %p62 = scmp.eq.s32.totalorder %s24, 1
      %p63 = por %p61, %p62
      %p64 = scmp.ne.s32.totalorder %s55, %s56
      %p65 = scmp.eq.s32.totalorder %s24, 0
      %p66 = por %p64, %p65
      %p67 = scmp.ne.s32.totalorder %s55, %s56
      %p68 = scmp.eq.s32.totalorder %s25, 1
      %p69 = por %p67, %p68
      %p71 = scmp.ne.s32.totalorder %s56, %s70
      %p72 = scmp.eq.s32.totalorder %s25, 0
      %p73 = por %p71, %p72
      %s75 = sadd.s32 %s74, 1
      %p78 = scmp.eq.s32.totalorder %s19, 1
      %p79 = scmp.ne.s32.totalorder %s74, %s76
      %p80 = scmp.eq.s32.totalorder %s19, 0
      %p81 = por %p79, %p80
      %p82 = scmp.ne.s32.totalorder %s74, %s76
      %p83 = scmp.eq.s32.totalorder %s24, 1
      %p84 = por %p82, %p83
      %p85 = scmp.ne.s32.totalorder %s76, %s77
      %p86 = scmp.eq.s32.totalorder %s24, 0
      %p87 = por %p85, %p86
      %p88 = scmp.ne.s32.totalorder %s76, %s77
      %p89 = scmp.eq.s32.totalorder %s25, 1
      %p90 = por %p88, %p89
      %p92 = scmp.ne.s32.totalorder %s77, %s91
      %p93 = scmp.eq.s32.totalorder %s25, 0
      %p94 = por %p92, %p93
      %s96 = sadd.s32 %s95, 1
      %p99 = scmp.eq.s32.totalorder %s19, 1
      %p100 = scmp.ne.s32.totalorder %s95, %s97
      %p101 = scmp.eq.s32.totalorder %s19, 0
      %p102 = por %p100, %p101
      %p103 = scmp.ne.s32.totalorder %s95, %s97
      %p104 = scmp.eq.s32.totalorder %s24, 1
      %p105 = por %p103, %p104
      %p106 = scmp.ne.s32.totalorder %s97, %s98
      %p107 = scmp.eq.s32.totalorder %s24, 0
      %p108 = por %p106, %p107
      %p109 = scmp.ne.s32.totalorder %s97, %s98
      %p110 = scmp.eq.s32.totalorder %s25, 1
      %p111 = por %p109, %p110
      %p113 = scmp.ne.s32.totalorder %s98, %s112
      %p114 = scmp.eq.s32.totalorder %s25, 0
      %p115 = por %p113, %p114
      %s117 = sadd.s32 %s116, 1
      %p120 = scmp.eq.s32.totalorder %s19, 1
      %p121 = scmp.ne.s32.totalorder %s116, %s118
      %p122 = scmp.eq.s32.totalorder %s19, 0
      %p123 = por %p121, %p122
      %p124 = scmp.ne.s32.totalorder %s116, %s118
      %p125 = scmp.eq.s32.totalorder %s24, 1
      %p126 = por %p124, %p125
      %p127 = scmp.ne.s32.totalorder %s118, %s119
      %p128 = scmp.eq.s32.totalorder %s24, 0
      %p129 = por %p127, %p128
      %p130 = scmp.ne.s32.totalorder %s118, %s119
      %p131 = scmp.eq.s32.totalorder %s25, 1
      %p132 = por %p130, %p131
      %p134 = scmp.ne.s32.totalorder %s119, %s133
      %p135 = scmp.eq.s32.totalorder %s25, 0
      %p136 = por %p134, %p135
      %s137 = ssub.s32 %s19, %s26
      %p138 = scmp.eq.s32.totalorder %s137, 0
      %s140 = sadd.s32 %s139, 1
      %s141 = scalar_select %p138, %s139, %s140
      %p144 = pneg %p138
      %p145 = scmp.eq.s32.totalorder %s19, 1
      %p146 = por %p144, %p145
      %p147 = scmp.ne.s32.totalorder %s139, %s142
      %p148 = scmp.eq.s32.totalorder %s19, 0
      %p149 = por %p147, %p148
      %p150 = scmp.ne.s32.totalorder %s139, %s142
      %p151 = scmp.eq.s32.totalorder %s24, 1
      %p152 = por %p150, %p151
      %p153 = scmp.ne.s32.totalorder %s142, %s143
      %p154 = scmp.eq.s32.totalorder %s24, 0
      %p155 = por %p153, %p154
      %p156 = scmp.ne.s32.totalorder %s142, %s143
      %p157 = scmp.eq.s32.totalorder %s25, 1
      %p158 = por %p156, %p157
      %p160 = scmp.ne.s32.totalorder %s143, %s159
      %p161 = scmp.eq.s32.totalorder %s25, 0
      %p162 = por %p160, %p161
      %p163 = scmp.le.s32.totalorder 1, %s19
      %p164 = scmp.lt.s32.totalorder %s19, 3
      %p165 = pnand %p163, %p164
      %p166 = pneg %p165
      // Predicated region
      $region9: #{tpu_custom_call.1} parent=5 // pred_check
        _
      $region10: #{tpu_custom_call.1} parent=5 // pred_check_branch
        %168 = sbr.rel (%p165) target = $region12
      $region11: #{tpu_custom_call.1} parent=5 // pred_region
        %s169 = ssub.s32 %s19, 1
        // Predicated region
        $region13: #{tpu_custom_call.1} parent=11 // pred_check
          %p170 = pneg %p66
        $region14: #{tpu_custom_call.1} parent=11 // pred_check_branch
          %172 = sbr.rel (%p170) target = $region16
        $region15: #{tpu_custom_call.1} parent=11 // pred_region
          %174 = vsyncadd [#allocation6], 0
          %s175 = sshll.u32 %s1, 4
          %s176 = int_to_ptr.hbm [resolvable:$true] %s175
          %s177 = sshll.u32 [#allocation5], 4
          %s178 = int_to_ptr.vmem [resolvable:$true] %s177
          %183 = dma.hbm_to_vmem [thread:$0]  %s176, 4096, %s178, [#allocation6], 256, 256, 16
        $region16: #{tpu_custom_call.1} parent=11 // pred_fallthru
          _
        // Predicated region
        $region17: #{tpu_custom_call.1} parent=11 // pred_check
          %p184 = pneg %p87
        $region18: #{tpu_custom_call.1} parent=11 // pred_check_branch
          %186 = sbr.rel (%p184) target = $region20
        $region19: #{tpu_custom_call.1} parent=11 // pred_region
          %188 = vsyncadd [#allocation6], 0
          %s190 = sshll.u32 %s2, 4
          %s191 = int_to_ptr.hbm [resolvable:$true] %s190
          %s192 = sshll.u32 [#allocation7], 4
          %s193 = int_to_ptr.vmem [resolvable:$true] %s192
          %195 = dma.hbm_to_vmem [thread:$0]  %s191, 32, %s193, [#allocation6]
        $region20: #{tpu_custom_call.1} parent=11 // pred_fallthru
          _
        // Predicated region
        $region21: #{tpu_custom_call.1} parent=11 // pred_check
          %p196 = pneg %p108
        $region22: #{tpu_custom_call.1} parent=11 // pred_check_branch
          %198 = sbr.rel (%p196) target = $region24
        $region23: #{tpu_custom_call.1} parent=11 // pred_region
          %200 = vsyncadd [#allocation9], 0
          %s201 = sshll.u32 %s3, 4
          %s202 = int_to_ptr.hbm [resolvable:$true] %s201
          %s203 = sshll.u32 [#allocation8], 4
          %s204 = int_to_ptr.vmem [resolvable:$true] %s203
          %209 = dma.hbm_to_vmem [thread:$0]  %s202, 4096, %s204, [#allocation9], 128, 128, 8
        $region24: #{tpu_custom_call.1} parent=11 // pred_fallthru
          _
        // Predicated region
        $region25: #{tpu_custom_call.1} parent=11 // pred_check
          %p210 = pneg %p129
        $region26: #{tpu_custom_call.1} parent=11 // pred_check_branch
          %212 = sbr.rel (%p210) target = $region28
        $region27: #{tpu_custom_call.1} parent=11 // pred_region
          _
        $region28: #{tpu_custom_call.1} parent=11 // pred_fallthru
          _
      $region12: #{tpu_custom_call.1} parent=5 // pred_fallthru
        _
      %p213 = scmp.lt.s32.totalorder %s19, 2
      // Predicated region
      $region29: #{tpu_custom_call.1} parent=5 // pred_check
        %p214 = pneg %p213
      $region30: #{tpu_custom_call.1} parent=5 // pred_check_branch
        %216 = sbr.rel (%p214) target = $region32
      $region31: #{tpu_custom_call.1} parent=5 // pred_region
        // Predicated region
        $region33: #{tpu_custom_call.1} parent=31 // pred_check
          %p217 = pneg %p39
        $region34: #{tpu_custom_call.1} parent=31 // pred_check_branch
          %219 = sbr.rel (%p217) target = $region36
        $region35: #{tpu_custom_call.1} parent=31 // pred_region
          %s220 = sand.u32 %s29, 1
          %s221 = scalar_lea.sflag [#allocation3], %s220
          %s222 = sand.u32 %s29, 1
          %s223 = smul.addr %s222, 8
          %s224 = scalar_lea.vmem [#allocation2], %s223
          %226 = vsyncadd %s221, 0
          %s227 = smul.addr %s19, 8
          %s228 = scalar_lea.hbm %s0, %s227
          %s230 = sshll.u32 %s228, 4
          %s231 = int_to_ptr.hbm [resolvable:$true] %s230
          %s232 = sshll.u32 %s224, 4
          %s233 = int_to_ptr.vmem [resolvable:$true] %s232
          %235 = dma.hbm_to_vmem [thread:$0]  %s231, 128, %s233, %s221
        $region36: #{tpu_custom_call.1} parent=31 // pred_fallthru
          _
      $region32: #{tpu_custom_call.1} parent=5 // pred_fallthru
        _
      %p236 = scmp.le.s32.totalorder 1, %s19
      %p237 = scmp.lt.s32.totalorder %s19, 3
      %p238 = pnand %p236, %p237
      %p239 = pneg %p238
      // Predicated region
      $region37: #{tpu_custom_call.1} parent=5 // pred_check
        _
      $region38: #{tpu_custom_call.1} parent=5 // pred_check_branch
        %241 = sbr.rel (%p238) target = $region40
      $region39: #{tpu_custom_call.1} parent=5 // pred_region
        %s242 = ssub.s32 %s19, 1
        %s243 = sand.u32 %s32, 1
        %s244 = scalar_lea.sflag [#allocation3], %s243
        %s245 = sand.u32 %s32, 1
        %s246 = smul.addr %s245, 8
        %s247 = scalar_lea.vmem [#allocation2], %s246
        // Predicated region
        $region41: #{tpu_custom_call.1} parent=39 // pred_check
          %p248 = pneg %p45
        $region42: #{tpu_custom_call.1} parent=39 // pred_check_branch
          %250 = sbr.rel (%p248) target = $region44
        $region43: #{tpu_custom_call.1} parent=39 // pred_region
          %252 = dma.done %s244, 128
        $region44: #{tpu_custom_call.1} parent=39 // pred_fallthru
          _
        // Predicated region
        $region45: #{tpu_custom_call.1} parent=39 // pred_check
          %p253 = pneg %p66
        $region46: #{tpu_custom_call.1} parent=39 // pred_check_branch
          %255 = sbr.rel (%p253) target = $region48
        $region47: #{tpu_custom_call.1} parent=39 // pred_region
          %257 = dma.done [#allocation6], 4096
        $region48: #{tpu_custom_call.1} parent=39 // pred_fallthru
          _
        // Predicated region
        $region49: #{tpu_custom_call.1} parent=39 // pred_check
          %p258 = pneg %p87
        $region50: #{tpu_custom_call.1} parent=39 // pred_check_branch
          %260 = sbr.rel (%p258) target = $region52
        $region51: #{tpu_custom_call.1} parent=39 // pred_region
          %262 = dma.done [#allocation6], 32
        $region52: #{tpu_custom_call.1} parent=39 // pred_fallthru
          _
        // Predicated region
        $region53: #{tpu_custom_call.1} parent=39 // pred_check
          %p263 = pneg %p108
        $region54: #{tpu_custom_call.1} parent=39 // pred_check_branch
          %265 = sbr.rel (%p263) target = $region56
        $region55: #{tpu_custom_call.1} parent=39 // pred_region
          %267 = dma.done [#allocation9], 4096
        $region56: #{tpu_custom_call.1} parent=39 // pred_fallthru
          _
        %s268 = sand.u32 %s32, 1
        %s269 = scalar_lea.sflag [#allocation3], %s268
        %s270 = sand.u32 %s32, 1
        %s271 = smul.addr %s270, 8
        %s272 = scalar_lea.vmem [#allocation2], %s271
        %p273 = pneg %p45
        %p274 = pneg %p42
        %p275 = pneg %p66
        %p276 = pneg %p63
        %p277 = pneg %p87
        %p278 = pneg %p84
        %p279 = pneg %p108
        %p280 = pneg %p105
        %p281 = pneg %p129
        %p282 = pneg %p126
        %p283 = pneg %p155
        %p284 = pneg %p152
        %s285 = sand.u32 %s142, 1
        %s286 = scalar_lea.sflag [#allocation4], %s285
        %s287 = sand.u32 %s142, 1
        %s288 = smul.addr %s287, 8
        %s289 = scalar_lea.vmem [#allocation10], %s288
        %v290 = vld [vmem:[%s247] sm:$0xff]
        %v291 = vld [vmem:[#allocation5] sm:$0xff]
        %v292 = vld [vmem:[#allocation5 + $0x8] sm:$0xff]
        %v293 = vld [vmem:[#allocation5 + $0x10] sm:$0xff]
        %v294 = vld [vmem:[#allocation5 + $0x18] sm:$0xff]
        %v295 = vld [vmem:[#allocation5 + $0x20] sm:$0xff]
        %v296 = vld [vmem:[#allocation5 + $0x28] sm:$0xff]
        %v297 = vld [vmem:[#allocation5 + $0x30] sm:$0xff]
        %v298 = vld [vmem:[#allocation5 + $0x38] sm:$0xff]
        %v299 = vld [vmem:[#allocation5 + $0x40] sm:$0xff]
        %v300 = vld [vmem:[#allocation5 + $0x48] sm:$0xff]
        %v301 = vld [vmem:[#allocation5 + $0x50] sm:$0xff]
        %v302 = vld [vmem:[#allocation5 + $0x58] sm:$0xff]
        %v303 = vld [vmem:[#allocation5 + $0x60] sm:$0xff]
        %v304 = vld [vmem:[#allocation5 + $0x68] sm:$0xff]
        %v305 = vld [vmem:[#allocation5 + $0x70] sm:$0xff]
        %v306 = vld [vmem:[#allocation5 + $0x78] sm:$0xff]
        %v307 = vld [vmem:[#allocation5 + $0x80] sm:$0xff]
        %v308 = vld [vmem:[#allocation5 + $0x88] sm:$0xff]
        %v309 = vld [vmem:[#allocation5 + $0x90] sm:$0xff]
        %v310 = vld [vmem:[#allocation5 + $0x98] sm:$0xff]
        %v311 = vld [vmem:[#allocation5 + $0xa0] sm:$0xff]
        %v312 = vld [vmem:[#allocation5 + $0xa8] sm:$0xff]
        %v313 = vld [vmem:[#allocation5 + $0xb0] sm:$0xff]
        %v314 = vld [vmem:[#allocation5 + $0xb8] sm:$0xff]
        %v315 = vld [vmem:[#allocation5 + $0xc0] sm:$0xff]
        %v316 = vld [vmem:[#allocation5 + $0xc8] sm:$0xff]
        %v317 = vld [vmem:[#allocation5 + $0xd0] sm:$0xff]
        %v318 = vld [vmem:[#allocation5 + $0xd8] sm:$0xff]
        %v319 = vld [vmem:[#allocation5 + $0xe0] sm:$0xff]
        %v320 = vld [vmem:[#allocation5 + $0xe8] sm:$0xff]
        %v321 = vld [vmem:[#allocation5 + $0xf0] sm:$0xff]
        %v322 = vld [vmem:[#allocation5 + $0xf8] sm:$0xff]
        %v323 = vld [vmem:[#allocation7] sm:$0x3]
        %v325 = vperm.slane %v323, 0
        %v326 = vperm.slane %v323, 1
        %329 = vmatpush.msra.mxu0 %v321
        %330 = vmatpush.msra.mxu0 %v319
        %331 = vmatpush.msra.mxu0 %v317
        %332 = vmatpush.msra.mxu0 %v315
        %333 = vmatpush.msra.mxu0 %v313
        %334 = vmatpush.msra.mxu0 %v311
        %335 = vmatpush.msra.mxu0 %v309
        %336 = vmatpush.msra.mxu0 %v307
        %337 = vmatpush.msra.mxu0 %v305
        %338 = vmatpush.msra.mxu0 %v303
        %339 = vmatpush.msra.mxu0 %v301
        %340 = vmatpush.msra.mxu0 %v299
        %341 = vmatpush.msra.mxu0 %v297
        %342 = vmatpush.msra.mxu0 %v295
        %343 = vmatpush.msra.mxu0 %v293
        %344 = vmatpush.msra.mxu0 %v291
        %345 = vmatmul.f32.gmra.mxu0 %v290
        %v346 = vpop.f32.mrf.mxu0
        %v347 = vadd.f32 %v325, %v346
        %348 = vdwg.mxu0
        %349 = vmatpush.msra.mxu0 %v322
        %350 = vmatpush.msra.mxu0 %v320
        %351 = vmatpush.msra.mxu0 %v318
        %352 = vmatpush.msra.mxu0 %v316
        %353 = vmatpush.msra.mxu0 %v314
        %354 = vmatpush.msra.mxu0 %v312
        %355 = vmatpush.msra.mxu0 %v310
        %356 = vmatpush.msra.mxu0 %v308
        %357 = vmatpush.msra.mxu0 %v306
        %358 = vmatpush.msra.mxu0 %v304
        %359 = vmatpush.msra.mxu0 %v302
        %360 = vmatpush.msra.mxu0 %v300
        %361 = vmatpush.msra.mxu0 %v298
        %362 = vmatpush.msra.mxu0 %v296
        %363 = vmatpush.msra.mxu0 %v294
        %364 = vmatpush.msra.mxu0 %v292
        %365 = vmatmul.f32.gmra.mxu0 %v290
        %v366 = vpop.f32.mrf.mxu0
        %v367 = vadd.f32 %v326, %v366
        %368 = vdwg.mxu0
        %v369 = vmax.f32 %v347, 0.0
        %v370 = vmax.f32 %v367, 0.0
        %v371 = vld [vmem:[#allocation8] sm:$0xff]
        %v372 = vld [vmem:[#allocation8 + $0x8] sm:$0xff]
        %v373 = vld [vmem:[#allocation8 + $0x10] sm:$0xff]
        %v374 = vld [vmem:[#allocation8 + $0x18] sm:$0xff]
        %v375 = vld [vmem:[#allocation8 + $0x20] sm:$0xff]
        %v376 = vld [vmem:[#allocation8 + $0x28] sm:$0xff]
        %v377 = vld [vmem:[#allocation8 + $0x30] sm:$0xff]
        %v378 = vld [vmem:[#allocation8 + $0x38] sm:$0xff]
        %v379 = vld [vmem:[#allocation8 + $0x40] sm:$0xff]
        %v380 = vld [vmem:[#allocation8 + $0x48] sm:$0xff]
        %v381 = vld [vmem:[#allocation8 + $0x50] sm:$0xff]
        %v382 = vld [vmem:[#allocation8 + $0x58] sm:$0xff]
        %v383 = vld [vmem:[#allocation8 + $0x60] sm:$0xff]
        %v384 = vld [vmem:[#allocation8 + $0x68] sm:$0xff]
        %v385 = vld [vmem:[#allocation8 + $0x70] sm:$0xff]
        %v386 = vld [vmem:[#allocation8 + $0x78] sm:$0xff]
        %v387 = vld [vmem:[#allocation8 + $0x80] sm:$0xff]
        %v388 = vld [vmem:[#allocation8 + $0x88] sm:$0xff]
        %v389 = vld [vmem:[#allocation8 + $0x90] sm:$0xff]
        %v390 = vld [vmem:[#allocation8 + $0x98] sm:$0xff]
        %v391 = vld [vmem:[#allocation8 + $0xa0] sm:$0xff]
        %v392 = vld [vmem:[#allocation8 + $0xa8] sm:$0xff]
        %v393 = vld [vmem:[#allocation8 + $0xb0] sm:$0xff]
        %v394 = vld [vmem:[#allocation8 + $0xb8] sm:$0xff]
        %v395 = vld [vmem:[#allocation8 + $0xc0] sm:$0xff]
        %v396 = vld [vmem:[#allocation8 + $0xc8] sm:$0xff]
        %v397 = vld [vmem:[#allocation8 + $0xd0] sm:$0xff]
        %v398 = vld [vmem:[#allocation8 + $0xd8] sm:$0xff]
        %v399 = vld [vmem:[#allocation8 + $0xe0] sm:$0xff]
        %v400 = vld [vmem:[#allocation8 + $0xe8] sm:$0xff]
        %v401 = vld [vmem:[#allocation8 + $0xf0] sm:$0xff]
        %v402 = vld [vmem:[#allocation8 + $0xf8] sm:$0xff]
        %v403 = vld [vmem:[%s4] sm:$0x1]
        %v405 = vperm.slane %v403, 0
        %407 = vmatpush.msra.mxu0 %v386
        %408 = vmatpush.msra.mxu0 %v385
        %409 = vmatpush.msra.mxu0 %v384
        %410 = vmatpush.msra.mxu0 %v383
        %411 = vmatpush.msra.mxu0 %v382
        %412 = vmatpush.msra.mxu0 %v381
        %413 = vmatpush.msra.mxu0 %v380
        %414 = vmatpush.msra.mxu0 %v379
        %415 = vmatpush.msra.mxu0 %v378
        %416 = vmatpush.msra.mxu0 %v377
        %417 = vmatpush.msra.mxu0 %v376
        %418 = vmatpush.msra.mxu0 %v375
        %419 = vmatpush.msra.mxu0 %v374
        %420 = vmatpush.msra.mxu0 %v373
        %421 = vmatpush.msra.mxu0 %v372
        %422 = vmatpush.msra.mxu0 %v371
        %423 = vmatmul.f32.gmra.mxu0 %v369
        %v424 = vpop.f32.mrf.mxu0
        %v425 = vadd.f32 %v405, %v424
        %426 = vdwg.mxu0
        %427 = vmatpush.msra.mxu0 %v402
        %428 = vmatpush.msra.mxu0 %v401
        %429 = vmatpush.msra.mxu0 %v400
        %430 = vmatpush.msra.mxu0 %v399
        %431 = vmatpush.msra.mxu0 %v398
        %432 = vmatpush.msra.mxu0 %v397
        %433 = vmatpush.msra.mxu0 %v396
        %434 = vmatpush.msra.mxu0 %v395
        %435 = vmatpush.msra.mxu0 %v394
        %436 = vmatpush.msra.mxu0 %v393
        %437 = vmatpush.msra.mxu0 %v392
        %438 = vmatpush.msra.mxu0 %v391
        %439 = vmatpush.msra.mxu0 %v390
        %440 = vmatpush.msra.mxu0 %v389
        %441 = vmatpush.msra.mxu0 %v388
        %442 = vmatpush.msra.mxu0 %v387
        %443 = vmatmul.f32.gmra.mxu0 %v370
        %v444 = vpop.f32.mrf.mxu0
        %v445 = vadd.f32 %v425, %v444
        %446 = vdwg.mxu0
        %447 = vst [vmem:[%s289] sm:$0xff] %v445
        %s448 = sand.u32 %s142, 1
        %s449 = scalar_lea.sflag [#allocation4], %s448
        %s450 = sand.u32 %s142, 1
        %s451 = smul.addr %s450, 8
        %s452 = scalar_lea.vmem [#allocation10], %s451
        // Predicated region
        $region57: #{tpu_custom_call.1} parent=39 // pred_check
          %p453 = pneg %p152
        $region58: #{tpu_custom_call.1} parent=39 // pred_check_branch
          %455 = sbr.rel (%p453) target = $region60
        $region59: #{tpu_custom_call.1} parent=39 // pred_region
          %457 = vsyncadd %s449, 0
          %s458 = smul.addr %s24, 8
          %s459 = scalar_lea.hbm %s5, %s458
          %s461 = sshll.u32 %s452, 4
          %s462 = int_to_ptr.vmem [resolvable:$true] %s461
          %s463 = sshll.u32 %s459, 4
          %s464 = int_to_ptr.hbm [resolvable:$true] %s463
          %466 = dma.vmem_to_hbm [thread:$0]  %s462, 128, %s464, %s449
        $region60: #{tpu_custom_call.1} parent=39 // pred_fallthru
          _
      $region40: #{tpu_custom_call.1} parent=5 // pred_fallthru
        _
      %p467 = scmp.le.s32.totalorder 2, %s19
      // Predicated region
      $region61: #{tpu_custom_call.1} parent=5 // pred_check
        %p468 = pneg %p467
      $region62: #{tpu_custom_call.1} parent=5 // pred_check_branch
        %470 = sbr.rel (%p468) target = $region64
      $region63: #{tpu_custom_call.1} parent=5 // pred_region
        %s471 = ssub.s32 %s19, 2
        // Predicated region
        $region65: #{tpu_custom_call.1} parent=63 // pred_check
          %p472 = pneg %p158
        $region66: #{tpu_custom_call.1} parent=63 // pred_check_branch
          %474 = sbr.rel (%p472) target = $region68
        $region67: #{tpu_custom_call.1} parent=63 // pred_region
          %s475 = sand.u32 %s143, 1
          %s476 = scalar_lea.sflag [#allocation4], %s475
          %s477 = sand.u32 %s143, 1
          %s478 = smul.addr %s477, 8
          %s479 = scalar_lea.vmem [#allocation10], %s478
          %481 = dma.done %s476, 128
        $region68: #{tpu_custom_call.1} parent=63 // pred_fallthru
          _
      $region64: #{tpu_custom_call.1} parent=5 // pred_fallthru
        _
    $region6: #{tpu_custom_call.1} parent=1 // loop_footer
      %s23 = sadd.s32 1, %s19
    $region7: #{tpu_custom_call.1} parent=1 // loop_footer_branch
      %18 = sbr.rel target = $region3
    $region8: #{tpu_custom_call.1} parent=1 // loop_exit
      _
    %482 = vsyncpa [#allocation3], 1
    %s483 = scalar_lea.sflag [#allocation3], 1
    %484 = vsyncpa %s483, 1
    %485 = vsyncpa [#allocation6], 1
    %486 = vsyncpa [#allocation9], 1
    %487 = vsyncpa [#allocation4], 1
    %s488 = scalar_lea.sflag [#allocation4], 1
    %489 = vsyncpa %s488, 1

</llo_original>
